<compile_context>
chip_gen: v6e
topology: v6e:2x2x1
jax: 0.10.0
libtpu: 0.0.40
codegen_flags: <defaults>
</compile_context>

<pallas_src>
import jax
import jax.numpy as jnp
from jax.experimental import pallas as pl
from jax.experimental.pallas import tpu as pltpu


def _exchange(n, dtype):
    """(n, n) anti-diagonal matrix: right-multiplying reverses the last axis."""
    i = jnp.arange(n)
    return (i[:, None] + i[None, :] == n - 1).astype(dtype)


def _blockdiag_reverse(c, h, dtype):
    """(c*h, c*h) block-diagonal permutation: left-multiplying a (c*h, W) slab
    reverses the h rows inside each of the c channel blocks (vertical flip)."""
    idx = jnp.arange(c * h)
    src = (idx // h) * h + (h - 1 - idx % h)
    return (src[:, None] == idx[None, :]).astype(dtype)


def _flip_one_tensor(x_ref, o_ref, ew_ref, pv_ref, hflip, vflip):
    """Apply (optional) H-flip then V-flip to one (1, C*H, W) sample block."""
    # No horizontal flip -> plain VMEM copy (also covers the no-op case).
    @pl.when(jnp.logical_not(hflip))
    def _():
        o_ref[...] = x_ref[...]

    # Horizontal flip: reverse W via one batched (C*H, W) @ (W, W) exchange dot.
    @pl.when(hflip)
    def _():
        y = jnp.dot(x_ref[0], ew_ref[...], preferred_element_type=jnp.float32)
        o_ref[0, :, :] = y.astype(o_ref.dtype)

    # Vertical flip: reverse H inside each channel block via one left dot.
    @pl.when(vflip)
    def _():
        z = jnp.dot(pv_ref[...], o_ref[0], preferred_element_type=jnp.float32)
        o_ref[0, :, :] = z.astype(o_ref.dtype)


def _aug_kernel(hflip_ref, vflip_ref,            # scalar prefetch (SMEM)
                x_ref, t_ref, ew_ref, pvx_ref, pvt_ref,   # inputs (VMEM)
                ox_ref, ot_ref):                 # outputs (VMEM)
    b = pl.program_id(0)
    hf = hflip_ref[b] != 0
    vf = vflip_ref[b] != 0
    _flip_one_tensor(x_ref, ox_ref, ew_ref, pvx_ref, hf, vf)
    _flip_one_tensor(t_ref, ot_ref, ew_ref, pvt_ref, hf, vf)


def data_augmentation(inputs, targets, key):
    """Pallas port of DataAugmentation.forward.

    Samples per-batch-element hflip / vflip decisions with p=0.25 and applies
    identical flips to `inputs` and `targets` in a single fused kernel.
    """
    N, Cx, H, W = inputs.shape
    Nt, Ct, Ht, Wt = targets.shape
    assert (N, H, W) == (Nt, Ht, Wt), "inputs/targets must share batch & spatial dims"
    dtype = inputs.dtype

    kh, kv = jax.random.split(key)
    hflip = jax.random.bernoulli(kh, 0.25, (N,)).astype(jnp.int32)
    vflip = jax.random.bernoulli(kv, 0.25, (N,)).astype(jnp.int32)

    # Hoisted, grid-resident permutation matrices.
    ew = _exchange(W, dtype)                       # (W, W)
    pvx = _blockdiag_reverse(Cx, H, dtype)         # (Cx*H, Cx*H)
    pvt = _blockdiag_reverse(Ct, H, targets.dtype) # (Ct*H, Ct*H)

    # Free wrapper-side reshape: one 2-D (C*H, W) slab per sample.
    x3 = inputs.reshape(N, Cx * H, W)
    t3 = targets.reshape(N, Ct * H, W)

    idx_sample = lambda b, hf, vf: (b, 0, 0)   # per-sample block
    idx_const = lambda b, hf, vf: (0, 0)       # resident across the whole grid

    out_x, out_t = pl.pallas_call(
        _aug_kernel,
        out_shape=(jax.ShapeDtypeStruct((N, Cx * H, W), dtype),
                   jax.ShapeDtypeStruct((N, Ct * H, W), targets.dtype)),
        grid_spec=pltpu.PrefetchScalarGridSpec(
            num_scalar_prefetch=2,
            grid=(N,),
            in_specs=[
                pl.BlockSpec((1, Cx * H, W), idx_sample),
                pl.BlockSpec((1, Ct * H, W), idx_sample),
                pl.BlockSpec((W, W), idx_const),
                pl.BlockSpec((Cx * H, Cx * H), idx_const),
                pl.BlockSpec((Ct * H, Ct * H), idx_const),
            ],
            out_specs=[
                pl.BlockSpec((1, Cx * H, W), idx_sample),
                pl.BlockSpec((1, Ct * H, W), idx_sample),
            ],
        ),
        compiler_params=pltpu.CompilerParams(
            dimension_semantics=("parallel",)),
    )(hflip, vflip, x3, t3, ew, pvx, pvt)

    return out_x.reshape(inputs.shape), out_t.reshape(targets.shape)


if __name__ == "__main__":
    key = jax.random.PRNGKey(0)
    k_in, k_tg, k_aug = jax.random.split(key, 3)

    # Small NCHW shapes consistent with image inputs/targets.
    inputs = jax.random.normal(k_in, (2, 4, 16, 16), dtype=jnp.float32)
    targets = jax.random.normal(k_tg, (2, 1, 16, 16), dtype=jnp.float32)

    out_in, out_tg = data_augmentation(inputs, targets, k_aug)
    jax.block_until_ready((out_in, out_tg))

    # Pure-JAX reference with identical deterministic flip decisions.
    N = inputs.shape[0]
    kh, kv = jax.random.split(k_aug)
    hf = jax.random.bernoulli(kh, 0.25, (N,))
    vf = jax.random.bernoulli(kv, 0.25, (N,))

    def ref(x):
        x = jnp.where(hf[:, None, None, None], jnp.flip(x, axis=-1), x)
        x = jnp.where(vf[:, None, None, None], jnp.flip(x, axis=-2), x)
        return x

    assert jnp.allclose(out_in, ref(inputs)), "inputs mismatch"
    assert jnp.allclose(out_tg, ref(targets)), "targets mismatch"
    print("KERNEL_OK")
</pallas_src>

<mosaic_0001>
module attributes {stable_mosaic.version = 11 : i64} {
  func.func @_aug_kernel(%arg0: i32, %arg1: memref<2xi32, #tpu.memory_space<smem>>, %arg2: memref<2xi32, #tpu.memory_space<smem>>, %arg3: memref<1x64x16xf32, #tpu.memory_space<vmem>>, %arg4: memref<1x16x16xf32, #tpu.memory_space<vmem>>, %arg5: memref<16x16xf32, #tpu.memory_space<vmem>>, %arg6: memref<64x64xf32, #tpu.memory_space<vmem>>, %arg7: memref<16x16xf32, #tpu.memory_space<vmem>>, %arg8: memref<1x64x16xf32, #tpu.memory_space<vmem>>, %arg9: memref<1x16x16xf32, #tpu.memory_space<vmem>>) attributes {dimension_semantics = [#tpu.dimension_semantics<parallel>], iteration_bounds = array<i64: 2>, scalar_prefetch = 2 : i64, scratch_operands = 0 : i64, tpu.core_type = #tpu.core_type<tc>, window_params = [{transform_indices = @transform_0, window_bounds = array<i64: 1, 64, 16>}, {transform_indices = @transform_1, window_bounds = array<i64: 1, 16, 16>}, {pipeline_mode = #tpu.pipeline_mode<synchronous>, transform_indices = @transform_2, window_bounds = array<i64: 16, 16>}, {pipeline_mode = #tpu.pipeline_mode<synchronous>, transform_indices = @transform_3, window_bounds = array<i64: 64, 64>}, {pipeline_mode = #tpu.pipeline_mode<synchronous>, transform_indices = @transform_4, window_bounds = array<i64: 16, 16>}, {transform_indices = @transform_5, window_bounds = array<i64: 1, 64, 16>}, {transform_indices = @transform_6, window_bounds = array<i64: 1, 16, 16>}]} {
    %0 = arith.index_cast %arg0 : i32 to index
    %1 = memref.load %arg1[%0] : memref<2xi32, #tpu.memory_space<smem>>
    %c0_i32 = arith.constant 0 : i32
    %2 = arith.cmpi ne, %1, %c0_i32 : i32
    %3 = arith.index_cast %arg0 : i32 to index
    %4 = memref.load %arg2[%3] : memref<2xi32, #tpu.memory_space<smem>>
    %c0_i32_0 = arith.constant 0 : i32
    %5 = arith.cmpi ne, %4, %c0_i32_0 : i32
    %true = arith.constant true
    %6 = arith.xori %2, %true : i1
    %7 = arith.extui %6 : i1 to i32
    %c0_i32_1 = arith.constant 0 : i32
    %8 = arith.cmpi ne, %7, %c0_i32_1 : i32
    scf.if %8 {
      %c0 = arith.constant 0 : index
      %c0_8 = arith.constant 0 : index
      %c0_9 = arith.constant 0 : index
      %20 = vector.load %arg3[%c0, %c0_8, %c0_9] : memref<1x64x16xf32, #tpu.memory_space<vmem>>, vector<1x64x16xf32>
      %c0_10 = arith.constant 0 : index
      %c0_11 = arith.constant 0 : index
      %c0_12 = arith.constant 0 : index
      %21 = vector.load %arg8[%c0_10, %c0_11, %c0_12] : memref<1x64x16xf32, #tpu.memory_space<vmem>>, vector<1x64x16xf32>
      tpu.vector_store %arg8[%c0_10, %c0_11, %c0_12], %20 {strides = array<i32>} : memref<1x64x16xf32, #tpu.memory_space<vmem>>, vector<1x64x16xf32>,
    } else {
    }
    %9 = arith.extui %2 : i1 to i32
    %c0_i32_2 = arith.constant 0 : i32
    %10 = arith.cmpi ne, %9, %c0_i32_2 : i32
    scf.if %10 {
      %c0 = arith.constant 0 : index
      %c0_8 = arith.constant 0 : index
      %c0_9 = arith.constant 0 : index
      %20 = vector.load %arg3[%c0, %c0_8, %c0_9] : memref<1x64x16xf32, #tpu.memory_space<vmem>>, vector<1x64x16xf32>
      %21 = vector.shape_cast %20 : vector<1x64x16xf32> to vector<64x16xf32>
      %c0_10 = arith.constant 0 : index
      %c0_11 = arith.constant 0 : index
      %22 = vector.load %arg5[%c0_10, %c0_11] : memref<16x16xf32, #tpu.memory_space<vmem>>, vector<16x16xf32>
      %cst = arith.constant dense<0.000000e+00> : vector<64x16xf32>
      %23 = tpu.matmul %21, %22, %cst {dimension_numbers = #tpu.dot_dimension_numbers<[1], [0], [0], [1], [0, 0, 1, 1], [], []>} : vector<64x16xf32>, vector<16x16xf32>, vector<64x16xf32> -> vector<64x16xf32>
      %c0_12 = arith.constant 0 : index
      %c0_13 = arith.constant 0 : index
      %c0_14 = arith.constant 0 : index
      %24 = vector.load %arg8[%c0_12, %c0_13, %c0_14] : memref<1x64x16xf32, #tpu.memory_space<vmem>>, vector<1x64x16xf32>
      %25 = vector.shape_cast %24 : vector<1x64x16xf32> to vector<64x16xf32>
      %26 = vector.shape_cast %23 : vector<64x16xf32> to vector<1x64x16xf32>
      tpu.vector_store %arg8[%c0_12, %c0_13, %c0_14], %26 {strides = array<i32>} : memref<1x64x16xf32, #tpu.memory_space<vmem>>, vector<1x64x16xf32>,
    } else {
    }
    %11 = arith.extui %5 : i1 to i32
    %c0_i32_3 = arith.constant 0 : i32
    %12 = arith.cmpi ne, %11, %c0_i32_3 : i32
    scf.if %12 {
      %c0 = arith.constant 0 : index
      %c0_8 = arith.constant 0 : index
      %20 = vector.load %arg6[%c0, %c0_8] : memref<64x64xf32, #tpu.memory_space<vmem>>, vector<64x64xf32>
      %c0_9 = arith.constant 0 : index
      %c0_10 = arith.constant 0 : index
      %c0_11 = arith.constant 0 : index
      %21 = vector.load %arg8[%c0_9, %c0_10, %c0_11] : memref<1x64x16xf32, #tpu.memory_space<vmem>>, vector<1x64x16xf32>
      %22 = vector.shape_cast %21 : vector<1x64x16xf32> to vector<64x16xf32>
      %cst = arith.constant dense<0.000000e+00> : vector<64x16xf32>
      %23 = tpu.matmul %20, %22, %cst {dimension_numbers = #tpu.dot_dimension_numbers<[1], [0], [0], [1], [0, 0, 1, 1], [], []>} : vector<64x64xf32>, vector<64x16xf32>, vector<64x16xf32> -> vector<64x16xf32>
      %c0_12 = arith.constant 0 : index
      %c0_13 = arith.constant 0 : index
      %c0_14 = arith.constant 0 : index
      %24 = vector.load %arg8[%c0_12, %c0_13, %c0_14] : memref<1x64x16xf32, #tpu.memory_space<vmem>>, vector<1x64x16xf32>
      %25 = vector.shape_cast %24 : vector<1x64x16xf32> to vector<64x16xf32>
      %26 = vector.shape_cast %23 : vector<64x16xf32> to vector<1x64x16xf32>
      tpu.vector_store %arg8[%c0_12, %c0_13, %c0_14], %26 {strides = array<i32>} : memref<1x64x16xf32, #tpu.memory_space<vmem>>, vector<1x64x16xf32>,
    } else {
    }
    %true_4 = arith.constant true
    %13 = arith.xori %2, %true_4 : i1
    %14 = arith.extui %13 : i1 to i32
    %c0_i32_5 = arith.constant 0 : i32
    %15 = arith.cmpi ne, %14, %c0_i32_5 : i32
    scf.if %15 {
      %c0 = arith.constant 0 : index
      %c0_8 = arith.constant 0 : index
      %c0_9 = arith.constant 0 : index
      %20 = vector.load %arg4[%c0, %c0_8, %c0_9] : memref<1x16x16xf32, #tpu.memory_space<vmem>>, vector<1x16x16xf32>
      %c0_10 = arith.constant 0 : index
      %c0_11 = arith.constant 0 : index
      %c0_12 = arith.constant 0 : index
      %21 = vector.load %arg9[%c0_10, %c0_11, %c0_12] : memref<1x16x16xf32, #tpu.memory_space<vmem>>, vector<1x16x16xf32>
      tpu.vector_store %arg9[%c0_10, %c0_11, %c0_12], %20 {strides = array<i32>} : memref<1x16x16xf32, #tpu.memory_space<vmem>>, vector<1x16x16xf32>,
    } else {
    }
    %16 = arith.extui %2 : i1 to i32
    %c0_i32_6 = arith.constant 0 : i32
    %17 = arith.cmpi ne, %16, %c0_i32_6 : i32
    scf.if %17 {
      %c0 = arith.constant 0 : index
      %c0_8 = arith.constant 0 : index
      %c0_9 = arith.constant 0 : index
      %20 = vector.load %arg4[%c0, %c0_8, %c0_9] : memref<1x16x16xf32, #tpu.memory_space<vmem>>, vector<1x16x16xf32>
      %21 = vector.shape_cast %20 : vector<1x16x16xf32> to vector<16x16xf32>
      %c0_10 = arith.constant 0 : index
      %c0_11 = arith.constant 0 : index
      %22 = vector.load %arg5[%c0_10, %c0_11] : memref<16x16xf32, #tpu.memory_space<vmem>>, vector<16x16xf32>
      %cst = arith.constant dense<0.000000e+00> : vector<16x16xf32>
      %23 = tpu.matmul %21, %22, %cst {dimension_numbers = #tpu.dot_dimension_numbers<[1], [0], [0], [1], [0, 0, 1, 1], [], []>} : vector<16x16xf32>, vector<16x16xf32>, vector<16x16xf32> -> vector<16x16xf32>
      %c0_12 = arith.constant 0 : index
      %c0_13 = arith.constant 0 : index
      %c0_14 = arith.constant 0 : index
      %24 = vector.load %arg9[%c0_12, %c0_13, %c0_14] : memref<1x16x16xf32, #tpu.memory_space<vmem>>, vector<1x16x16xf32>
      %25 = vector.shape_cast %24 : vector<1x16x16xf32> to vector<16x16xf32>
      %26 = vector.shape_cast %23 : vector<16x16xf32> to vector<1x16x16xf32>
      tpu.vector_store %arg9[%c0_12, %c0_13, %c0_14], %26 {strides = array<i32>} : memref<1x16x16xf32, #tpu.memory_space<vmem>>, vector<1x16x16xf32>,
    } else {
    }
    %18 = arith.extui %5 : i1 to i32
    %c0_i32_7 = arith.constant 0 : i32
    %19 = arith.cmpi ne, %18, %c0_i32_7 : i32
    scf.if %19 {
      %c0 = arith.constant 0 : index
      %c0_8 = arith.constant 0 : index
      %20 = vector.load %arg7[%c0, %c0_8] : memref<16x16xf32, #tpu.memory_space<vmem>>, vector<16x16xf32>
      %c0_9 = arith.constant 0 : index
      %c0_10 = arith.constant 0 : index
      %c0_11 = arith.constant 0 : index
      %21 = vector.load %arg9[%c0_9, %c0_10, %c0_11] : memref<1x16x16xf32, #tpu.memory_space<vmem>>, vector<1x16x16xf32>
      %22 = vector.shape_cast %21 : vector<1x16x16xf32> to vector<16x16xf32>
      %cst = arith.constant dense<0.000000e+00> : vector<16x16xf32>
      %23 = tpu.matmul %20, %22, %cst {dimension_numbers = #tpu.dot_dimension_numbers<[1], [0], [0], [1], [0, 0, 1, 1], [], []>} : vector<16x16xf32>, vector<16x16xf32>, vector<16x16xf32> -> vector<16x16xf32>
      %c0_12 = arith.constant 0 : index
      %c0_13 = arith.constant 0 : index
      %c0_14 = arith.constant 0 : index
      %24 = vector.load %arg9[%c0_12, %c0_13, %c0_14] : memref<1x16x16xf32, #tpu.memory_space<vmem>>, vector<1x16x16xf32>
      %25 = vector.shape_cast %24 : vector<1x16x16xf32> to vector<16x16xf32>
      %26 = vector.shape_cast %23 : vector<16x16xf32> to vector<1x16x16xf32>
      tpu.vector_store %arg9[%c0_12, %c0_13, %c0_14], %26 {strides = array<i32>} : memref<1x16x16xf32, #tpu.memory_space<vmem>>, vector<1x16x16xf32>,
    } else {
    }
    return
  }
  func.func @transform_0(%arg0: i32, %arg1: memref<2xi32, #tpu.memory_space<smem>>, %arg2: memref<2xi32, #tpu.memory_space<smem>>) -> (i32, i32, i32) {
    %c0_i32 = arith.constant 0 : i32
    %c0_i32_0 = arith.constant 0 : i32
    %c0_i32_1 = arith.constant 0 : i32
    return %arg0, %c0_i32, %c0_i32_0 : i32, i32, i32
  }
  func.func @transform_1(%arg0: i32, %arg1: memref<2xi32, #tpu.memory_space<smem>>, %arg2: memref<2xi32, #tpu.memory_space<smem>>) -> (i32, i32, i32) {
    %c0_i32 = arith.constant 0 : i32
    %c0_i32_0 = arith.constant 0 : i32
    %c0_i32_1 = arith.constant 0 : i32
    return %arg0, %c0_i32, %c0_i32_0 : i32, i32, i32
  }
  func.func @transform_2(%arg0: i32, %arg1: memref<2xi32, #tpu.memory_space<smem>>, %arg2: memref<2xi32, #tpu.memory_space<smem>>) -> (i32, i32) {
    %c0_i32 = arith.constant 0 : i32
    %c0_i32_0 = arith.constant 0 : i32
    %c0_i32_1 = arith.constant 0 : i32
    return %c0_i32, %c0_i32_0 : i32, i32
  }
  func.func @transform_3(%arg0: i32, %arg1: memref<2xi32, #tpu.memory_space<smem>>, %arg2: memref<2xi32, #tpu.memory_space<smem>>) -> (i32, i32) {
    %c0_i32 = arith.constant 0 : i32
    %c0_i32_0 = arith.constant 0 : i32
    %c0_i32_1 = arith.constant 0 : i32
    return %c0_i32, %c0_i32_0 : i32, i32
  }
  func.func @transform_4(%arg0: i32, %arg1: memref<2xi32, #tpu.memory_space<smem>>, %arg2: memref<2xi32, #tpu.memory_space<smem>>) -> (i32, i32) {
    %c0_i32 = arith.constant 0 : i32
    %c0_i32_0 = arith.constant 0 : i32
    %c0_i32_1 = arith.constant 0 : i32
    return %c0_i32, %c0_i32_0 : i32, i32
  }
  func.func @transform_5(%arg0: i32, %arg1: memref<2xi32, #tpu.memory_space<smem>>, %arg2: memref<2xi32, #tpu.memory_space<smem>>) -> (i32, i32, i32) {
    %c0_i32 = arith.constant 0 : i32
    %c0_i32_0 = arith.constant 0 : i32
    %c0_i32_1 = arith.constant 0 : i32
    return %arg0, %c0_i32, %c0_i32_0 : i32, i32, i32
  }
  func.func @transform_6(%arg0: i32, %arg1: memref<2xi32, #tpu.memory_space<smem>>, %arg2: memref<2xi32, #tpu.memory_space<smem>>) -> (i32, i32, i32) {
    %c0_i32 = arith.constant 0 : i32
    %c0_i32_0 = arith.constant 0 : i32
    %c0_i32_1 = arith.constant 0 : i32
    return %arg0, %c0_i32, %c0_i32_0 : i32, i32, i32
  }
}

</mosaic_0001>

<llo_original>
// kernel: tpu_custom_call.1
$region0: #{tpu_custom_call.1}
  #allocation0 [shape = 'u32[]', space=smem, size = 0x4, offset = 0x4, fixed_abs, tag = 'smem constant byte address 0x4 - core index']
  #allocation1 [shape = 'u32[144,128]{1,0:T(1,128)}', space=vmem, size = 0x12000, scoped, tag = 'internal scratch']
  #allocation2 [shape = 's32[1]{0}', space=sflag, size = 0x4, scoped, tag = 'scoped memory for tpu_custom_call.1']
  #allocation3 [shape = 'u8[512]{0}', space=smem, size = 0x200, scoped, tag = 'prefetched SMEM operand 0']
  #allocation4 [shape = 'u8[512]{0}', space=smem, size = 0x200, scoped, tag = 'prefetched SMEM operand 1']
  %s0 = inlined_call_operand.vmem [shape: s32[2], index: 0, kind: input, shape index: {}]
  %s1 = inlined_call_operand.vmem [shape: s32[2], index: 1, kind: input, shape index: {}]
  %s2 = inlined_call_operand.vmem [shape: f32[2,64,16], index: 2, kind: input, shape index: {}]
  %s3 = inlined_call_operand.vmem [shape: f32[2,16,16], index: 3, kind: input, shape index: {}]
  %s4 = inlined_call_operand.vmem [shape: f32[16,16], index: 4, kind: input, shape index: {}]
  %s5 = inlined_call_operand.vmem [shape: f32[64,64], index: 5, kind: input, shape index: {}]
  %s6 = inlined_call_operand.vmem [shape: f32[16,16], index: 6, kind: input, shape index: {}]
  %s7 = inlined_call_operand.vmem [shape: f32[2,64,16], index: 7, kind: output, shape index: {0}]
  %s8 = inlined_call_operand.hbm [shape: f32[2,16,16], index: 8, kind: output, shape index: {1}]
  %9 = xla_tuple %s7, %s8
  %s10 = sld [smem:[#allocation0]]
  $region85: #{tpu_custom_call.1} parent=0
    _
  %s12 = ssub.s32 1, %s10
  %s13 = scalar_select 0, %s12, %s10
  %s14 = sshll.u32 %s0, 4
  %s15 = int_to_ptr.vmem [resolvable:$true] %s14
  %17 = dma.vmem_to_smem %s15, 16, [#allocation3], [#allocation2]
  %s18 = sshll.u32 %s1, 4
  %s19 = int_to_ptr.vmem [resolvable:$true] %s18
  %21 = dma.vmem_to_smem %s19, 16, [#allocation4], [#allocation2]
  %22 = dma.done [#allocation2], 32
  %23 = sfence
  $region1: #{tpu_custom_call.1} parent=0
    #allocation5 [shape = 'u8[16384]{0}', space=vmem, size = 0x4000, scoped, tag = 'output window, operand 1']
    #allocation6 [shape = 's32[2]{0}', space=sflag, size = 0x8, scoped, tag = 'scoped memory for tpu_custom_call.1']
    %24 = vsyncpa [#allocation6], 0
    %s25 = scalar_lea.sflag [#allocation6], 1
    %26 = vsyncpa %s25, 0
    loop: start=0, step=1, limit=4
    $region2: #{tpu_custom_call.1} parent=1 // loop_pre_header
      _
    $region3: #{tpu_custom_call.1} parent=1 // loop_header
      %s28 = sphi 0, %s32
      %p29 = scmp.ge.s32.totalorder %s28, 4
      %s38 = sphi 0, %s40
      %s41 = sphi 0, %s38
      %s42 = sphi 0, %s41
      %s58 = sphi 0, %s42
      %s64 = sphi 0, %s66
      %s67 = sphi 0, %s64
      %s68 = sphi 0, %s67
      %s84 = sphi 0, %s68
      %s88 = sphi 0, %s88
      %s90 = sphi 0, %s88
      %s91 = sphi 0, %s90
      %s105 = sphi 0, %s91
      %s109 = sphi 0, %s109
      %s111 = sphi 0, %s109
      %s112 = sphi 0, %s111
      %s126 = sphi 0, %s112
      %s130 = sphi 0, %s130
      %s132 = sphi 0, %s130
      %s133 = sphi 0, %s132
      %s147 = sphi 0, %s133
      %s153 = sphi 0, %s155
      %s156 = sphi 0, %s153
      %s157 = sphi 0, %s156
      %s173 = sphi 0, %s157
      %s179 = sphi 0, %s181
      %s182 = sphi 0, %s179
      %s183 = sphi 0, %s182
      %s199 = sphi 0, %s183
    $region4: #{tpu_custom_call.1} parent=1 // loop_header_branch
      %31 = sbr.rel (%p29) target = $region8
    $region5: #{tpu_custom_call.1} parent=1 // loop_body
      %s33 = ssub.s32 %s28, 1
      %s34 = ssub.s32 %s28, 2
      %s35 = sadd.s32 %s28, 1
      %s36 = ssub.s32 %s28, %s35
      %p37 = scmp.eq.s32.totalorder %s36, 0
      %s39 = sadd.s32 %s38, 1
      %s40 = scalar_select %p37, %s38, %s39
      %p43 = pneg %p37
      %p44 = scmp.eq.s32.totalorder %s28, 1
      %p45 = por %p43, %p44
      %p46 = scmp.ne.s32.totalorder %s38, %s41
      %p47 = scmp.eq.s32.totalorder %s28, 0
      %p48 = por %p46, %p47
      %p49 = scmp.ne.s32.totalorder %s38, %s41
      %p50 = scmp.eq.s32.totalorder %s33, 1
      %p51 = por %p49, %p50
      %p52 = scmp.ne.s32.totalorder %s41, %s42
      %p53 = scmp.eq.s32.totalorder %s33, 0
      %p54 = por %p52, %p53
      %p55 = scmp.ne.s32.totalorder %s41, %s42
      %p56 = scmp.eq.s32.totalorder %s34, 1
      %p57 = por %p55, %p56
      %p59 = scmp.ne.s32.totalorder %s42, %s58
      %p60 = scmp.eq.s32.totalorder %s34, 0
      %p61 = por %p59, %p60
      %s62 = ssub.s32 %s28, %s35
      %p63 = scmp.eq.s32.totalorder %s62, 0
      %s65 = sadd.s32 %s64, 1
      %s66 = scalar_select %p63, %s64, %s65
      %p69 = pneg %p63
      %p70 = scmp.eq.s32.totalorder %s28, 1
      %p71 = por %p69, %p70
      %p72 = scmp.ne.s32.totalorder %s64, %s67
      %p73 = scmp.eq.s32.totalorder %s28, 0
      %p74 = por %p72, %p73
      %p75 = scmp.ne.s32.totalorder %s64, %s67
      %p76 = scmp.eq.s32.totalorder %s33, 1
      %p77 = por %p75, %p76
      %p78 = scmp.ne.s32.totalorder %s67, %s68
      %p79 = scmp.eq.s32.totalorder %s33, 0
      %p80 = por %p78, %p79
      %p81 = scmp.ne.s32.totalorder %s67, %s68
      %p82 = scmp.eq.s32.totalorder %s34, 1
      %p83 = por %p81, %p82
      %p85 = scmp.ne.s32.totalorder %s68, %s84
      %p86 = scmp.eq.s32.totalorder %s34, 0
      %p87 = por %p85, %p86
      %s89 = sadd.s32 %s88, 1
      %p92 = scmp.eq.s32.totalorder %s28, 1
      %p93 = scmp.ne.s32.totalorder %s88, %s90
      %p94 = scmp.eq.s32.totalorder %s28, 0
      %p95 = por %p93, %p94
      %p96 = scmp.ne.s32.totalorder %s88, %s90
      %p97 = scmp.eq.s32.totalorder %s33, 1
      %p98 = por %p96, %p97
      %p99 = scmp.ne.s32.totalorder %s90, %s91
      %p100 = scmp.eq.s32.totalorder %s33, 0
      %p101 = por %p99, %p100
      %p102 = scmp.ne.s32.totalorder %s90, %s91
      %p103 = scmp.eq.s32.totalorder %s34, 1
      %p104 = por %p102, %p103
      %p106 = scmp.ne.s32.totalorder %s91, %s105
      %p107 = scmp.eq.s32.totalorder %s34, 0
      %p108 = por %p106, %p107
      %s110 = sadd.s32 %s109, 1
      %p113 = scmp.eq.s32.totalorder %s28, 1
      %p114 = scmp.ne.s32.totalorder %s109, %s111
      %p115 = scmp.eq.s32.totalorder %s28, 0
      %p116 = por %p114, %p115
      %p117 = scmp.ne.s32.totalorder %s109, %s111
      %p118 = scmp.eq.s32.totalorder %s33, 1
      %p119 = por %p117, %p118
      %p120 = scmp.ne.s32.totalorder %s111, %s112
      %p121 = scmp.eq.s32.totalorder %s33, 0
      %p122 = por %p120, %p121
      %p123 = scmp.ne.s32.totalorder %s111, %s112
      %p124 = scmp.eq.s32.totalorder %s34, 1
      %p125 = por %p123, %p124
      %p127 = scmp.ne.s32.totalorder %s112, %s126
      %p128 = scmp.eq.s32.totalorder %s34, 0
      %p129 = por %p127, %p128
      %s131 = sadd.s32 %s130, 1
      %p134 = scmp.eq.s32.totalorder %s28, 1
      %p135 = scmp.ne.s32.totalorder %s130, %s132
      %p136 = scmp.eq.s32.totalorder %s28, 0
      %p137 = por %p135, %p136
      %p138 = scmp.ne.s32.totalorder %s130, %s132
      %p139 = scmp.eq.s32.totalorder %s33, 1
      %p140 = por %p138, %p139
      %p141 = scmp.ne.s32.totalorder %s132, %s133
      %p142 = scmp.eq.s32.totalorder %s33, 0
      %p143 = por %p141, %p142
      %p144 = scmp.ne.s32.totalorder %s132, %s133
      %p145 = scmp.eq.s32.totalorder %s34, 1
      %p146 = por %p144, %p145
      %p148 = scmp.ne.s32.totalorder %s133, %s147
      %p149 = scmp.eq.s32.totalorder %s34, 0
      %p150 = por %p148, %p149
      %s151 = ssub.s32 %s28, %s35
      %p152 = scmp.eq.s32.totalorder %s151, 0
      %s154 = sadd.s32 %s153, 1
      %s155 = scalar_select %p152, %s153, %s154
      %p158 = pneg %p152
      %p159 = scmp.eq.s32.totalorder %s28, 1
      %p160 = por %p158, %p159
      %p161 = scmp.ne.s32.totalorder %s153, %s156
      %p162 = scmp.eq.s32.totalorder %s28, 0
      %p163 = por %p161, %p162
      %p164 = scmp.ne.s32.totalorder %s153, %s156
      %p165 = scmp.eq.s32.totalorder %s33, 1
      %p166 = por %p164, %p165
      %p167 = scmp.ne.s32.totalorder %s156, %s157
      %p168 = scmp.eq.s32.totalorder %s33, 0
      %p169 = por %p167, %p168
      %p170 = scmp.ne.s32.totalorder %s156, %s157
      %p171 = scmp.eq.s32.totalorder %s34, 1
      %p172 = por %p170, %p171
      %p174 = scmp.ne.s32.totalorder %s157, %s173
      %p175 = scmp.eq.s32.totalorder %s34, 0
      %p176 = por %p174, %p175
      %s177 = ssub.s32 %s28, %s35
      %p178 = scmp.eq.s32.totalorder %s177, 0
      %s180 = sadd.s32 %s179, 1
      %s181 = scalar_select %p178, %s179, %s180
      %p184 = pneg %p178
      %p185 = scmp.eq.s32.totalorder %s28, 1
      %p186 = por %p184, %p185
      %p187 = scmp.ne.s32.totalorder %s179, %s182
      %p188 = scmp.eq.s32.totalorder %s28, 0
      %p189 = por %p187, %p188
      %p190 = scmp.ne.s32.totalorder %s179, %s182
      %p191 = scmp.eq.s32.totalorder %s33, 1
      %p192 = por %p190, %p191
      %p193 = scmp.ne.s32.totalorder %s182, %s183
      %p194 = scmp.eq.s32.totalorder %s33, 0
      %p195 = por %p193, %p194
      %p196 = scmp.ne.s32.totalorder %s182, %s183
      %p197 = scmp.eq.s32.totalorder %s34, 1
      %p198 = por %p196, %p197
      %p200 = scmp.ne.s32.totalorder %s183, %s199
      %p201 = scmp.eq.s32.totalorder %s34, 0
      %p202 = por %p200, %p201
      %p203 = scmp.le.s32.totalorder 1, %s28
      %p204 = scmp.lt.s32.totalorder %s28, 3
      %p205 = pnand %p203, %p204
      %p206 = pneg %p205
      // Predicated region
      $region9: #{tpu_custom_call.1} parent=5 // pred_check
        _
      $region10: #{tpu_custom_call.1} parent=5 // pred_check_branch
        %208 = sbr.rel (%p205) target = $region12
      $region11: #{tpu_custom_call.1} parent=5 // pred_region
        %s209 = ssub.s32 %s28, 1
        // Predicated region
        $region13: #{tpu_custom_call.1} parent=11 // pred_check
          %p210 = pneg %p101
        $region14: #{tpu_custom_call.1} parent=11 // pred_check_branch
          %212 = sbr.rel (%p210) target = $region16
        $region15: #{tpu_custom_call.1} parent=11 // pred_region
          _
        $region16: #{tpu_custom_call.1} parent=11 // pred_fallthru
          _
        // Predicated region
        $region17: #{tpu_custom_call.1} parent=11 // pred_check
          %p213 = pneg %p122
        $region18: #{tpu_custom_call.1} parent=11 // pred_check_branch
          %215 = sbr.rel (%p213) target = $region20
        $region19: #{tpu_custom_call.1} parent=11 // pred_region
          _
        $region20: #{tpu_custom_call.1} parent=11 // pred_fallthru
          _
        // Predicated region
        $region21: #{tpu_custom_call.1} parent=11 // pred_check
          %p216 = pneg %p143
        $region22: #{tpu_custom_call.1} parent=11 // pred_check_branch
          %218 = sbr.rel (%p216) target = $region24
        $region23: #{tpu_custom_call.1} parent=11 // pred_region
          _
        $region24: #{tpu_custom_call.1} parent=11 // pred_fallthru
          _
      $region12: #{tpu_custom_call.1} parent=5 // pred_fallthru
        _
      %p219 = scmp.lt.s32.totalorder %s28, 2
      // Predicated region
      $region25: #{tpu_custom_call.1} parent=5 // pred_check
        %p220 = pneg %p219
      $region26: #{tpu_custom_call.1} parent=5 // pred_check_branch
        %222 = sbr.rel (%p220) target = $region28
      $region27: #{tpu_custom_call.1} parent=5 // pred_region
        // Predicated region
        $region29: #{tpu_custom_call.1} parent=27 // pred_check
          %p223 = pneg %p48
        $region30: #{tpu_custom_call.1} parent=27 // pred_check_branch
          %225 = sbr.rel (%p223) target = $region32
        $region31: #{tpu_custom_call.1} parent=27 // pred_region
          %p226 = scmp.lt.s32.totalorder %s28, 1
          %s227 = scalar_select %p226, %s28, 1
          %s228 = smul.addr %s227, 8
          %s229 = smul.addr %s228, 8
          %s230 = scalar_lea.vmem %s2, %s229
        $region32: #{tpu_custom_call.1} parent=27 // pred_fallthru
          _
        // Predicated region
        $region33: #{tpu_custom_call.1} parent=27 // pred_check
          %p231 = pneg %p74
        $region34: #{tpu_custom_call.1} parent=27 // pred_check_branch
          %233 = sbr.rel (%p231) target = $region36
        $region35: #{tpu_custom_call.1} parent=27 // pred_region
          %p234 = scmp.lt.s32.totalorder %s28, 1
          %s235 = scalar_select %p234, %s28, 1
          %s236 = smul.addr %s235, 2
          %s237 = smul.addr %s236, 8
          %s238 = scalar_lea.vmem %s3, %s237
        $region36: #{tpu_custom_call.1} parent=27 // pred_fallthru
          _
      $region28: #{tpu_custom_call.1} parent=5 // pred_fallthru
        _
      %p239 = scmp.le.s32.totalorder 1, %s28
      %p240 = scmp.lt.s32.totalorder %s28, 3
      %p241 = pnand %p239, %p240
      %p242 = pneg %p241
      // Predicated region
      $region37: #{tpu_custom_call.1} parent=5 // pred_check
        _
      $region38: #{tpu_custom_call.1} parent=5 // pred_check_branch
        %244 = sbr.rel (%p241) target = $region40
      $region39: #{tpu_custom_call.1} parent=5 // pred_region
        %s245 = ssub.s32 %s28, 1
        %p246 = scmp.lt.s32.totalorder %s33, 1
        %s247 = scalar_select %p246, %s33, 1
        %s248 = smul.addr %s247, 8
        %s249 = smul.addr %s248, 8
        %s250 = scalar_lea.vmem %s2, %s249
        %p251 = pneg %p54
        %p252 = pneg %p51
        %p253 = scmp.lt.s32.totalorder %s33, 1
        %s254 = scalar_select %p253, %s33, 1
        %s255 = smul.addr %s254, 2
        %s256 = smul.addr %s255, 8
        %s257 = scalar_lea.vmem %s3, %s256
        %p258 = pneg %p80
        %p259 = pneg %p77
        %p260 = pneg %p101
        %p261 = pneg %p98
        %p262 = pneg %p122
        %p263 = pneg %p119
        %p264 = pneg %p143
        %p265 = pneg %p140
        %p266 = pneg %p169
        %p267 = pneg %p166
        %p268 = scmp.lt.s32.totalorder %s33, 1
        %s269 = scalar_select %p268, %s33, 1
        %s270 = smul.addr %s269, 8
        %s271 = smul.addr %s270, 8
        %s272 = scalar_lea.vmem %s7, %s271
        %p273 = pneg %p195
        %p274 = pneg %p192
        %s275 = sand.u32 %s182, 1
        %s276 = scalar_lea.sflag [#allocation6], %s275
        %s277 = sand.u32 %s182, 1
        %s278 = smul.addr %s277, 16
        %s279 = scalar_lea.vmem [#allocation5], %s278
        %p280 = scmp.lt.s32.totalorder %s33, 1
        %s281 = scalar_select %p280, %s33, 1
        %s282 = smul.addr %s281, 8
        %s283 = smul.addr %s282, 8
        %s284 = scalar_lea.vmem %s2, %s283
        %p285 = scmp.lt.s32.totalorder %s33, 1
        %s286 = scalar_select %p285, %s33, 1
        %s287 = smul.addr %s286, 2
        %s288 = smul.addr %s287, 8
        %s289 = scalar_lea.vmem %s3, %s288
        %p290 = scmp.lt.s32.totalorder %s33, 1
        %s291 = scalar_select %p290, %s33, 1
        %s292 = smul.addr %s291, 8
        %s293 = smul.addr %s292, 8
        %s294 = scalar_lea.vmem %s7, %s293
        %s295 = sld [smem:[#allocation3 + %s33]]
        %p296 = scmp.ne.s32.totalorder %s295, 0
        %s297 = sld [smem:[#allocation4 + %s33]]
        %p298 = scmp.ne.s32.totalorder %s297, 0
        %p299 = scmp.eq.s32.totalorder %s295, 0
        // Predicated region
        $region41: #{tpu_custom_call.1} parent=39 // pred_check
          %p300 = pneg %p299
        $region42: #{tpu_custom_call.1} parent=39 // pred_check_branch
          %302 = sbr.rel (%p300) target = $region44
        $region43: #{tpu_custom_call.1} parent=39 // pred_region
          %v303 = vld [vmem:[%s284] sm:$0xff]
          %v304 = vld [vmem:[%s284 + $0x8] sm:$0xff]
          %v305 = vld [vmem:[%s284 + $0x10] sm:$0xff]
          %v306 = vld [vmem:[%s284 + $0x18] sm:$0xff]
          %v307 = vld [vmem:[%s284 + $0x20] sm:$0xff]
          %v308 = vld [vmem:[%s284 + $0x28] sm:$0xff]
          %v309 = vld [vmem:[%s284 + $0x30] sm:$0xff]
          %v310 = vld [vmem:[%s284 + $0x38] sm:$0xff]
          %vm311 = vcmask 130048
          %312 = vst.msk [vmem:[%s294] sm:$0xff] %vm311, %v303
          %313 = vst.msk [vmem:[%s294 + $0x8] sm:$0xff] %vm311, %v304
          %314 = vst.msk [vmem:[%s294 + $0x10] sm:$0xff] %vm311, %v305
          %315 = vst.msk [vmem:[%s294 + $0x18] sm:$0xff] %vm311, %v306
          %316 = vst.msk [vmem:[%s294 + $0x20] sm:$0xff] %vm311, %v307
          %317 = vst.msk [vmem:[%s294 + $0x28] sm:$0xff] %vm311, %v308
          %318 = vst.msk [vmem:[%s294 + $0x30] sm:$0xff] %vm311, %v309
          %319 = vst.msk [vmem:[%s294 + $0x38] sm:$0xff] %vm311, %v310
        $region44: #{tpu_custom_call.1} parent=39 // pred_fallthru
          _
        // Predicated region
        $region45: #{tpu_custom_call.1} parent=39 // pred_check
          %p320 = pneg %p296
        $region46: #{tpu_custom_call.1} parent=39 // pred_check_branch
          %322 = sbr.rel (%p320) target = $region48
        $region47: #{tpu_custom_call.1} parent=39 // pred_region
          %v323 = vld [vmem:[%s284] sm:$0xff]
          %v324 = vld [vmem:[%s284 + $0x8] sm:$0xff]
          %v325 = vld [vmem:[%s284 + $0x10] sm:$0xff]
          %v326 = vld [vmem:[%s284 + $0x18] sm:$0xff]
          %v327 = vld [vmem:[%s284 + $0x20] sm:$0xff]
          %v328 = vld [vmem:[%s284 + $0x28] sm:$0xff]
          %v329 = vld [vmem:[%s284 + $0x30] sm:$0xff]
          %v330 = vld [vmem:[%s284 + $0x38] sm:$0xff]
          %v331 = vld [vmem:[%s4] sm:$0xff]
          %v332 = vld [vmem:[%s4 + $0x8] sm:$0xff]
          %vm333 = vcmask 130048
          %v335 = vsel %vm333, %v323, 0
          %v338 = vsel %vm333, %v324, 0
          %v341 = vsel %vm333, %v325, 0
          %v344 = vsel %vm333, %v326, 0
          %v347 = vsel %vm333, %v327, 0
          %v350 = vsel %vm333, %v328, 0
          %v353 = vsel %vm333, %v329, 0
          %v356 = vsel %vm333, %v330, 0
          %358 = vmatprep.subr.mxu0 0.0
          %359 = vmatpush1.msra.mxu0 0.0
          %360 = vmatprep.subr.mxu0 0.0
          %361 = vmatpush1.msra.mxu0 0.0
          %362 = vmatprep.subr.mxu0 0.0
          %363 = vmatpush1.msra.mxu0 0.0
          %364 = vmatprep.subr.mxu0 0.0
          %365 = vmatpush1.msra.mxu0 0.0
          %366 = vmatprep.subr.mxu0 0.0
          %367 = vmatpush1.msra.mxu0 0.0
          %368 = vmatprep.subr.mxu0 0.0
          %369 = vmatpush1.msra.mxu0 0.0
          %370 = vmatprep.subr.mxu0 0.0
          %371 = vmatpush1.msra.mxu0 0.0
          %372 = vmatprep.subr.mxu0 0.0
          %373 = vmatpush1.msra.mxu0 0.0
          %374 = vmatprep.subr.mxu0 0.0
          %375 = vmatpush1.msra.mxu0 0.0
          %376 = vmatprep.subr.mxu0 0.0
          %377 = vmatpush1.msra.mxu0 0.0
          %378 = vmatprep.subr.mxu0 0.0
          %379 = vmatpush1.msra.mxu0 0.0
          %380 = vmatprep.subr.mxu0 0.0
          %381 = vmatpush1.msra.mxu0 0.0
          %382 = vmatprep.subr.mxu0 0.0
          %383 = vmatpush1.msra.mxu0 0.0
          %384 = vmatprep.subr.mxu0 0.0
          %385 = vmatpush1.msra.mxu0 0.0
          %386 = vmatprep.subr.mxu0 0.0
          %387 = vmatpush1.msra.mxu0 %v332
          %388 = vmatprep.subr.mxu0 0.0
          %389 = vmatpush1.msra.mxu0 %v331
          %390 = vmatprep.subr.mxu0 0.0
          %391 = vmatpush2.msra.mxu0 0.0
          %392 = vmatprep.subr.mxu0 0.0
          %393 = vmatpush2.msra.mxu0 0.0
          %394 = vmatprep.subr.mxu0 0.0
          %395 = vmatpush2.msra.mxu0 0.0
          %396 = vmatprep.subr.mxu0 0.0
          %397 = vmatpush2.msra.mxu0 0.0
          %398 = vmatprep.subr.mxu0 0.0
          %399 = vmatpush2.msra.mxu0 0.0
          %400 = vmatprep.subr.mxu0 0.0
          %401 = vmatpush2.msra.mxu0 0.0
          %402 = vmatprep.subr.mxu0 0.0
          %403 = vmatpush2.msra.mxu0 0.0
          %404 = vmatprep.subr.mxu0 0.0
          %405 = vmatpush2.msra.mxu0 0.0
          %406 = vmatprep.subr.mxu0 0.0
          %407 = vmatpush2.msra.mxu0 0.0
          %408 = vmatprep.subr.mxu0 0.0
          %409 = vmatpush2.msra.mxu0 0.0
          %410 = vmatprep.subr.mxu0 0.0
          %411 = vmatpush2.msra.mxu0 0.0
          %412 = vmatprep.subr.mxu0 0.0
          %413 = vmatpush2.msra.mxu0 0.0
          %414 = vmatprep.subr.mxu0 0.0
          %415 = vmatpush2.msra.mxu0 0.0
          %416 = vmatprep.subr.mxu0 0.0
          %417 = vmatpush2.msra.mxu0 0.0
          %418 = vmatprep.subr.mxu0 0.0
          %419 = vmatpush2.msra.mxu0 0.0
          %420 = vmatprep.subr.mxu0 0.0
          %421 = vmatpush2.msra.mxu0 0.0
          %422 = vmatprep.mubr.f32.mxu0 0.0
          %423 = vmatmul.mubr.f32.gmra.mxu0 %v335
          %v424 = vpop.f32.mrf.mxu0
          %v425 = vadd.f32 0.0, %v424
          %v426 = vpop.f32.mrf.mxu0
          %427 = vmatprep.mubr.f32.mxu0 0.0
          %428 = vmatmul.mubr.f32.gmra.mxu0 %v338
          %v429 = vpop.f32.mrf.mxu0
          %v430 = vadd.f32 0.0, %v429
          %v431 = vpop.f32.mrf.mxu0
          %432 = vmatprep.mubr.f32.mxu0 0.0
          %433 = vmatmul.mubr.f32.gmra.mxu0 %v341
          %v434 = vpop.f32.mrf.mxu0
          %v435 = vadd.f32 0.0, %v434
          %v436 = vpop.f32.mrf.mxu0
          %437 = vmatprep.mubr.f32.mxu0 0.0
          %438 = vmatmul.mubr.f32.gmra.mxu0 %v344
          %v439 = vpop.f32.mrf.mxu0
          %v440 = vadd.f32 0.0, %v439
          %v441 = vpop.f32.mrf.mxu0
          %442 = vmatprep.mubr.f32.mxu0 0.0
          %443 = vmatmul.mubr.f32.gmra.mxu0 %v347
          %v444 = vpop.f32.mrf.mxu0
          %v445 = vadd.f32 0.0, %v444
          %v446 = vpop.f32.mrf.mxu0
          %447 = vmatprep.mubr.f32.mxu0 0.0
          %448 = vmatmul.mubr.f32.gmra.mxu0 %v350
          %v449 = vpop.f32.mrf.mxu0
          %v450 = vadd.f32 0.0, %v449
          %v451 = vpop.f32.mrf.mxu0
          %452 = vmatprep.mubr.f32.mxu0 0.0
          %453 = vmatmul.mubr.f32.gmra.mxu0 %v353
          %v454 = vpop.f32.mrf.mxu0
          %v455 = vadd.f32 0.0, %v454
          %v456 = vpop.f32.mrf.mxu0
          %457 = vmatprep.mubr.f32.mxu0 0.0
          %458 = vmatmul.mubr.f32.gmra.mxu0 %v356
          %v459 = vpop.f32.mrf.mxu0
          %v460 = vadd.f32 0.0, %v459
          %v461 = vpop.f32.mrf.mxu0
          %462 = vdwg.mxu0
          %463 = vst.msk [vmem:[%s294] sm:$0xff] %vm333, %v425
          %464 = vst.msk [vmem:[%s294 + $0x8] sm:$0xff] %vm333, %v430
          %465 = vst.msk [vmem:[%s294 + $0x10] sm:$0xff] %vm333, %v435
          %466 = vst.msk [vmem:[%s294 + $0x18] sm:$0xff] %vm333, %v440
          %467 = vst.msk [vmem:[%s294 + $0x20] sm:$0xff] %vm333, %v445
          %468 = vst.msk [vmem:[%s294 + $0x28] sm:$0xff] %vm333, %v450
          %469 = vst.msk [vmem:[%s294 + $0x30] sm:$0xff] %vm333, %v455
          %470 = vst.msk [vmem:[%s294 + $0x38] sm:$0xff] %vm333, %v460
        $region48: #{tpu_custom_call.1} parent=39 // pred_fallthru
          _
        // Predicated region
        $region49: #{tpu_custom_call.1} parent=39 // pred_check
          %p471 = pneg %p298
        $region50: #{tpu_custom_call.1} parent=39 // pred_check_branch
          %473 = sbr.rel (%p471) target = $region52
        $region51: #{tpu_custom_call.1} parent=39 // pred_region
          %v474 = vld [vmem:[%s5] sm:$0xff]
          %v475 = vld [vmem:[%s5 + $0x8] sm:$0xff]
          %v476 = vld [vmem:[%s5 + $0x10] sm:$0xff]
          %v477 = vld [vmem:[%s5 + $0x18] sm:$0xff]
          %v478 = vld [vmem:[%s5 + $0x20] sm:$0xff]
          %v479 = vld [vmem:[%s5 + $0x28] sm:$0xff]
          %v480 = vld [vmem:[%s5 + $0x30] sm:$0xff]
          %v481 = vld [vmem:[%s5 + $0x38] sm:$0xff]
          %v482 = vld [vmem:[%s294] sm:$0xff]
          %v483 = vld [vmem:[%s294 + $0x8] sm:$0xff]
          %v484 = vld [vmem:[%s294 + $0x10] sm:$0xff]
          %v485 = vld [vmem:[%s294 + $0x18] sm:$0xff]
          %v486 = vld [vmem:[%s294 + $0x20] sm:$0xff]
          %v487 = vld [vmem:[%s294 + $0x28] sm:$0xff]
          %v488 = vld [vmem:[%s294 + $0x30] sm:$0xff]
          %v489 = vld [vmem:[%s294 + $0x38] sm:$0xff]
          %vm490 = vcmask 523264
          %v492 = vsel %vm490, %v474, 0
          %v495 = vsel %vm490, %v475, 0
          %v498 = vsel %vm490, %v476, 0
          %v501 = vsel %vm490, %v477, 0
          %v504 = vsel %vm490, %v478, 0
          %v507 = vsel %vm490, %v479, 0
          %v510 = vsel %vm490, %v480, 0
          %v513 = vsel %vm490, %v481, 0
          %515 = vmatprep.subr.mxu0 0.0
          %516 = vmatpush1.msra.mxu0 0.0
          %517 = vmatprep.subr.mxu0 0.0
          %518 = vmatpush1.msra.mxu0 0.0
          %519 = vmatprep.subr.mxu0 0.0
          %520 = vmatpush1.msra.mxu0 0.0
          %521 = vmatprep.subr.mxu0 0.0
          %522 = vmatpush1.msra.mxu0 0.0
          %523 = vmatprep.subr.mxu0 0.0
          %524 = vmatpush1.msra.mxu0 0.0
          %525 = vmatprep.subr.mxu0 0.0
          %526 = vmatpush1.msra.mxu0 0.0
          %527 = vmatprep.subr.mxu0 0.0
          %528 = vmatpush1.msra.mxu0 0.0
          %529 = vmatprep.subr.mxu0 0.0
          %530 = vmatpush1.msra.mxu0 0.0
          %531 = vmatprep.subr.mxu0 0.0
          %532 = vmatpush1.msra.mxu0 %v489
          %533 = vmatprep.subr.mxu0 0.0
          %534 = vmatpush1.msra.mxu0 %v488
          %535 = vmatprep.subr.mxu0 0.0
          %536 = vmatpush1.msra.mxu0 %v487
          %537 = vmatprep.subr.mxu0 0.0
          %538 = vmatpush1.msra.mxu0 %v486
          %539 = vmatprep.subr.mxu0 0.0
          %540 = vmatpush1.msra.mxu0 %v485
          %541 = vmatprep.subr.mxu0 0.0
          %542 = vmatpush1.msra.mxu0 %v484
          %543 = vmatprep.subr.mxu0 0.0
          %544 = vmatpush1.msra.mxu0 %v483
          %545 = vmatprep.subr.mxu0 0.0
          %546 = vmatpush1.msra.mxu0 %v482
          %547 = vmatprep.subr.mxu0 0.0
          %548 = vmatpush2.msra.mxu0 0.0
          %549 = vmatprep.subr.mxu0 0.0
          %550 = vmatpush2.msra.mxu0 0.0
          %551 = vmatprep.subr.mxu0 0.0
          %552 = vmatpush2.msra.mxu0 0.0
          %553 = vmatprep.subr.mxu0 0.0
          %554 = vmatpush2.msra.mxu0 0.0
          %555 = vmatprep.subr.mxu0 0.0
          %556 = vmatpush2.msra.mxu0 0.0
          %557 = vmatprep.subr.mxu0 0.0
          %558 = vmatpush2.msra.mxu0 0.0
          %559 = vmatprep.subr.mxu0 0.0
          %560 = vmatpush2.msra.mxu0 0.0
          %561 = vmatprep.subr.mxu0 0.0
          %562 = vmatpush2.msra.mxu0 0.0
          %563 = vmatprep.subr.mxu0 0.0
          %564 = vmatpush2.msra.mxu0 0.0
          %565 = vmatprep.subr.mxu0 0.0
          %566 = vmatpush2.msra.mxu0 0.0
          %567 = vmatprep.subr.mxu0 0.0
          %568 = vmatpush2.msra.mxu0 0.0
          %569 = vmatprep.subr.mxu0 0.0
          %570 = vmatpush2.msra.mxu0 0.0
          %571 = vmatprep.subr.mxu0 0.0
          %572 = vmatpush2.msra.mxu0 0.0
          %573 = vmatprep.subr.mxu0 0.0
          %574 = vmatpush2.msra.mxu0 0.0
          %575 = vmatprep.subr.mxu0 0.0
          %576 = vmatpush2.msra.mxu0 0.0
          %577 = vmatprep.subr.mxu0 0.0
          %578 = vmatpush2.msra.mxu0 0.0
          %579 = vmatprep.mubr.f32.mxu0 0.0
          %580 = vmatmul.mubr.f32.gmra.mxu0 %v492
          %v581 = vpop.f32.mrf.mxu0
          %v582 = vadd.f32 0.0, %v581
          %v583 = vpop.f32.mrf.mxu0
          %584 = vmatprep.mubr.f32.mxu0 0.0
          %585 = vmatmul.mubr.f32.gmra.mxu0 %v495
          %v586 = vpop.f32.mrf.mxu0
          %v587 = vadd.f32 0.0, %v586
          %v588 = vpop.f32.mrf.mxu0
          %589 = vmatprep.mubr.f32.mxu0 0.0
          %590 = vmatmul.mubr.f32.gmra.mxu0 %v498
          %v591 = vpop.f32.mrf.mxu0
          %v592 = vadd.f32 0.0, %v591
          %v593 = vpop.f32.mrf.mxu0
          %594 = vmatprep.mubr.f32.mxu0 0.0
          %595 = vmatmul.mubr.f32.gmra.mxu0 %v501
          %v596 = vpop.f32.mrf.mxu0
          %v597 = vadd.f32 0.0, %v596
          %v598 = vpop.f32.mrf.mxu0
          %599 = vmatprep.mubr.f32.mxu0 0.0
          %600 = vmatmul.mubr.f32.gmra.mxu0 %v504
          %v601 = vpop.f32.mrf.mxu0
          %v602 = vadd.f32 0.0, %v601
          %v603 = vpop.f32.mrf.mxu0
          %604 = vmatprep.mubr.f32.mxu0 0.0
          %605 = vmatmul.mubr.f32.gmra.mxu0 %v507
          %v606 = vpop.f32.mrf.mxu0
          %v607 = vadd.f32 0.0, %v606
          %v608 = vpop.f32.mrf.mxu0
          %609 = vmatprep.mubr.f32.mxu0 0.0
          %610 = vmatmul.mubr.f32.gmra.mxu0 %v510
          %v611 = vpop.f32.mrf.mxu0
          %v612 = vadd.f32 0.0, %v611
          %v613 = vpop.f32.mrf.mxu0
          %614 = vmatprep.mubr.f32.mxu0 0.0
          %615 = vmatmul.mubr.f32.gmra.mxu0 %v513
          %v616 = vpop.f32.mrf.mxu0
          %v617 = vadd.f32 0.0, %v616
          %v618 = vpop.f32.mrf.mxu0
          %619 = vdwg.mxu0
          %vm620 = vcmask 130048
          %621 = vst.msk [vmem:[%s294] sm:$0xff] %vm620, %v582
          %622 = vst.msk [vmem:[%s294 + $0x8] sm:$0xff] %vm620, %v587
          %623 = vst.msk [vmem:[%s294 + $0x10] sm:$0xff] %vm620, %v592
          %624 = vst.msk [vmem:[%s294 + $0x18] sm:$0xff] %vm620, %v597
          %625 = vst.msk [vmem:[%s294 + $0x20] sm:$0xff] %vm620, %v602
          %626 = vst.msk [vmem:[%s294 + $0x28] sm:$0xff] %vm620, %v607
          %627 = vst.msk [vmem:[%s294 + $0x30] sm:$0xff] %vm620, %v612
          %628 = vst.msk [vmem:[%s294 + $0x38] sm:$0xff] %vm620, %v617
        $region52: #{tpu_custom_call.1} parent=39 // pred_fallthru
          _
        // Predicated region
        $region53: #{tpu_custom_call.1} parent=39 // pred_check
          %p629 = pneg %p299
        $region54: #{tpu_custom_call.1} parent=39 // pred_check_branch
          %631 = sbr.rel (%p629) target = $region56
        $region55: #{tpu_custom_call.1} parent=39 // pred_region
          %v632 = vld [vmem:[%s289] sm:$0xff]
          %v633 = vld [vmem:[%s289 + $0x8] sm:$0xff]
          %vm634 = vcmask 130048
          %635 = vst.msk [vmem:[%s279] sm:$0xff] %vm634, %v632
          %636 = vst.msk [vmem:[%s279 + $0x8] sm:$0xff] %vm634, %v633
        $region56: #{tpu_custom_call.1} parent=39 // pred_fallthru
          _
        // Predicated region
        $region57: #{tpu_custom_call.1} parent=39 // pred_check
          %p637 = pneg %p296
        $region58: #{tpu_custom_call.1} parent=39 // pred_check_branch
          %639 = sbr.rel (%p637) target = $region60
        $region59: #{tpu_custom_call.1} parent=39 // pred_region
          %v640 = vld [vmem:[%s289] sm:$0xff]
          %v641 = vld [vmem:[%s289 + $0x8] sm:$0xff]
          %v642 = vld [vmem:[%s4] sm:$0xff]
          %v643 = vld [vmem:[%s4 + $0x8] sm:$0xff]
          %vm644 = vcmask 130048
          %v646 = vsel %vm644, %v640, 0
          %v649 = vsel %vm644, %v641, 0
          %651 = vmatprep.subr.mxu0 0.0
          %652 = vmatpush1.msra.mxu0 0.0
          %653 = vmatprep.subr.mxu0 0.0
          %654 = vmatpush1.msra.mxu0 0.0
          %655 = vmatprep.subr.mxu0 0.0
          %656 = vmatpush1.msra.mxu0 0.0
          %657 = vmatprep.subr.mxu0 0.0
          %658 = vmatpush1.msra.mxu0 0.0
          %659 = vmatprep.subr.mxu0 0.0
          %660 = vmatpush1.msra.mxu0 0.0
          %661 = vmatprep.subr.mxu0 0.0
          %662 = vmatpush1.msra.mxu0 0.0
          %663 = vmatprep.subr.mxu0 0.0
          %664 = vmatpush1.msra.mxu0 0.0
          %665 = vmatprep.subr.mxu0 0.0
          %666 = vmatpush1.msra.mxu0 0.0
          %667 = vmatprep.subr.mxu0 0.0
          %668 = vmatpush1.msra.mxu0 0.0
          %669 = vmatprep.subr.mxu0 0.0
          %670 = vmatpush1.msra.mxu0 0.0
          %671 = vmatprep.subr.mxu0 0.0
          %672 = vmatpush1.msra.mxu0 0.0
          %673 = vmatprep.subr.mxu0 0.0
          %674 = vmatpush1.msra.mxu0 0.0
          %675 = vmatprep.subr.mxu0 0.0
          %676 = vmatpush1.msra.mxu0 0.0
          %677 = vmatprep.subr.mxu0 0.0
          %678 = vmatpush1.msra.mxu0 0.0
          %679 = vmatprep.subr.mxu0 0.0
          %680 = vmatpush1.msra.mxu0 %v643
          %681 = vmatprep.subr.mxu0 0.0
          %682 = vmatpush1.msra.mxu0 %v642
          %683 = vmatprep.subr.mxu0 0.0
          %684 = vmatpush2.msra.mxu0 0.0
          %685 = vmatprep.subr.mxu0 0.0
          %686 = vmatpush2.msra.mxu0 0.0
          %687 = vmatprep.subr.mxu0 0.0
          %688 = vmatpush2.msra.mxu0 0.0
          %689 = vmatprep.subr.mxu0 0.0
          %690 = vmatpush2.msra.mxu0 0.0
          %691 = vmatprep.subr.mxu0 0.0
          %692 = vmatpush2.msra.mxu0 0.0
          %693 = vmatprep.subr.mxu0 0.0
          %694 = vmatpush2.msra.mxu0 0.0
          %695 = vmatprep.subr.mxu0 0.0
          %696 = vmatpush2.msra.mxu0 0.0
          %697 = vmatprep.subr.mxu0 0.0
          %698 = vmatpush2.msra.mxu0 0.0
          %699 = vmatprep.subr.mxu0 0.0
          %700 = vmatpush2.msra.mxu0 0.0
          %701 = vmatprep.subr.mxu0 0.0
          %702 = vmatpush2.msra.mxu0 0.0
          %703 = vmatprep.subr.mxu0 0.0
          %704 = vmatpush2.msra.mxu0 0.0
          %705 = vmatprep.subr.mxu0 0.0
          %706 = vmatpush2.msra.mxu0 0.0
          %707 = vmatprep.subr.mxu0 0.0
          %708 = vmatpush2.msra.mxu0 0.0
          %709 = vmatprep.subr.mxu0 0.0
          %710 = vmatpush2.msra.mxu0 0.0
          %711 = vmatprep.subr.mxu0 0.0
          %712 = vmatpush2.msra.mxu0 0.0
          %713 = vmatprep.subr.mxu0 0.0
          %714 = vmatpush2.msra.mxu0 0.0
          %715 = vmatprep.mubr.f32.mxu0 0.0
          %716 = vmatmul.mubr.f32.gmra.mxu0 %v646
          %v717 = vpop.f32.mrf.mxu0
          %v718 = vadd.f32 0.0, %v717
          %v719 = vpop.f32.mrf.mxu0
          %720 = vmatprep.mubr.f32.mxu0 0.0
          %721 = vmatmul.mubr.f32.gmra.mxu0 %v649
          %v722 = vpop.f32.mrf.mxu0
          %v723 = vadd.f32 0.0, %v722
          %v724 = vpop.f32.mrf.mxu0
          %725 = vdwg.mxu0
          %726 = vst.msk [vmem:[%s279] sm:$0xff] %vm644, %v718
          %727 = vst.msk [vmem:[%s279 + $0x8] sm:$0xff] %vm644, %v723
        $region60: #{tpu_custom_call.1} parent=39 // pred_fallthru
          _
        // Predicated region
        $region61: #{tpu_custom_call.1} parent=39 // pred_check
          %p728 = pneg %p298
        $region62: #{tpu_custom_call.1} parent=39 // pred_check_branch
          %730 = sbr.rel (%p728) target = $region64
        $region63: #{tpu_custom_call.1} parent=39 // pred_region
          %v731 = vld [vmem:[%s6] sm:$0xff]
          %v732 = vld [vmem:[%s6 + $0x8] sm:$0xff]
          %v733 = vld [vmem:[%s279] sm:$0xff]
          %v734 = vld [vmem:[%s279 + $0x8] sm:$0xff]
          %vm735 = vcmask 130048
          %v737 = vsel %vm735, %v731, 0
          %v740 = vsel %vm735, %v732, 0
          %742 = vmatprep.subr.mxu0 0.0
          %743 = vmatpush1.msra.mxu0 0.0
          %744 = vmatprep.subr.mxu0 0.0
          %745 = vmatpush1.msra.mxu0 0.0
          %746 = vmatprep.subr.mxu0 0.0
          %747 = vmatpush1.msra.mxu0 0.0
          %748 = vmatprep.subr.mxu0 0.0
          %749 = vmatpush1.msra.mxu0 0.0
          %750 = vmatprep.subr.mxu0 0.0
          %751 = vmatpush1.msra.mxu0 0.0
          %752 = vmatprep.subr.mxu0 0.0
          %753 = vmatpush1.msra.mxu0 0.0
          %754 = vmatprep.subr.mxu0 0.0
          %755 = vmatpush1.msra.mxu0 0.0
          %756 = vmatprep.subr.mxu0 0.0
          %757 = vmatpush1.msra.mxu0 0.0
          %758 = vmatprep.subr.mxu0 0.0
          %759 = vmatpush1.msra.mxu0 0.0
          %760 = vmatprep.subr.mxu0 0.0
          %761 = vmatpush1.msra.mxu0 0.0
          %762 = vmatprep.subr.mxu0 0.0
          %763 = vmatpush1.msra.mxu0 0.0
          %764 = vmatprep.subr.mxu0 0.0
          %765 = vmatpush1.msra.mxu0 0.0
          %766 = vmatprep.subr.mxu0 0.0
          %767 = vmatpush1.msra.mxu0 0.0
          %768 = vmatprep.subr.mxu0 0.0
          %769 = vmatpush1.msra.mxu0 0.0
          %770 = vmatprep.subr.mxu0 0.0
          %771 = vmatpush1.msra.mxu0 %v734
          %772 = vmatprep.subr.mxu0 0.0
          %773 = vmatpush1.msra.mxu0 %v733
          %774 = vmatprep.subr.mxu0 0.0
          %775 = vmatpush2.msra.mxu0 0.0
          %776 = vmatprep.subr.mxu0 0.0
          %777 = vmatpush2.msra.mxu0 0.0
          %778 = vmatprep.subr.mxu0 0.0
          %779 = vmatpush2.msra.mxu0 0.0
          %780 = vmatprep.subr.mxu0 0.0
          %781 = vmatpush2.msra.mxu0 0.0
          %782 = vmatprep.subr.mxu0 0.0
          %783 = vmatpush2.msra.mxu0 0.0
          %784 = vmatprep.subr.mxu0 0.0
          %785 = vmatpush2.msra.mxu0 0.0
          %786 = vmatprep.subr.mxu0 0.0
          %787 = vmatpush2.msra.mxu0 0.0
          %788 = vmatprep.subr.mxu0 0.0
          %789 = vmatpush2.msra.mxu0 0.0
          %790 = vmatprep.subr.mxu0 0.0
          %791 = vmatpush2.msra.mxu0 0.0
          %792 = vmatprep.subr.mxu0 0.0
          %793 = vmatpush2.msra.mxu0 0.0
          %794 = vmatprep.subr.mxu0 0.0
          %795 = vmatpush2.msra.mxu0 0.0
          %796 = vmatprep.subr.mxu0 0.0
          %797 = vmatpush2.msra.mxu0 0.0
          %798 = vmatprep.subr.mxu0 0.0
          %799 = vmatpush2.msra.mxu0 0.0
          %800 = vmatprep.subr.mxu0 0.0
          %801 = vmatpush2.msra.mxu0 0.0
          %802 = vmatprep.subr.mxu0 0.0
          %803 = vmatpush2.msra.mxu0 0.0
          %804 = vmatprep.subr.mxu0 0.0
          %805 = vmatpush2.msra.mxu0 0.0
          %806 = vmatprep.mubr.f32.mxu0 0.0
          %807 = vmatmul.mubr.f32.gmra.mxu0 %v737
          %v808 = vpop.f32.mrf.mxu0
          %v809 = vadd.f32 0.0, %v808
          %v810 = vpop.f32.mrf.mxu0
          %811 = vmatprep.mubr.f32.mxu0 0.0
          %812 = vmatmul.mubr.f32.gmra.mxu0 %v740
          %v813 = vpop.f32.mrf.mxu0
          %v814 = vadd.f32 0.0, %v813
          %v815 = vpop.f32.mrf.mxu0
          %816 = vdwg.mxu0
          %817 = vst.msk [vmem:[%s279] sm:$0xff] %vm735, %v809
          %818 = vst.msk [vmem:[%s279 + $0x8] sm:$0xff] %vm735, %v814
        $region64: #{tpu_custom_call.1} parent=39 // pred_fallthru
          _
        %p819 = scmp.lt.s32.totalorder %s33, 1
        %s820 = scalar_select %p819, %s33, 1
        %s821 = smul.addr %s820, 8
        %s822 = smul.addr %s821, 8
        %s823 = scalar_lea.vmem %s7, %s822
        %s824 = sand.u32 %s182, 1
        %s825 = scalar_lea.sflag [#allocation6], %s824
        %s826 = sand.u32 %s182, 1
        %s827 = smul.addr %s826, 16
        %s828 = scalar_lea.vmem [#allocation5], %s827
        // Predicated region
        $region65: #{tpu_custom_call.1} parent=39 // pred_check
          %p829 = pneg %p166
        $region66: #{tpu_custom_call.1} parent=39 // pred_check_branch
          %831 = sbr.rel (%p829) target = $region68
        $region67: #{tpu_custom_call.1} parent=39 // pred_region
          _
        $region68: #{tpu_custom_call.1} parent=39 // pred_fallthru
          _
        // Predicated region
        $region69: #{tpu_custom_call.1} parent=39 // pred_check
          %p832 = pneg %p192
        $region70: #{tpu_custom_call.1} parent=39 // pred_check_branch
          %834 = sbr.rel (%p832) target = $region72
        $region71: #{tpu_custom_call.1} parent=39 // pred_region
          %s836 = ssub.s32 256, 256
          %837 = vsyncadd %s825, %s836
          %s838 = smul.addr %s33, 2
          %s839 = smul.addr %s838, 128
          %s840 = scalar_lea.hbm %s8, %s839
          %s841 = sshll.u32 %s828, 4
          %s842 = int_to_ptr.vmem [resolvable:$true] %s841
          %847 = dma.vmem_to_hbm [thread:$0]  %s842, 256, %s840, %s825, 128, 128, 8
        $region72: #{tpu_custom_call.1} parent=39 // pred_fallthru
          _
      $region40: #{tpu_custom_call.1} parent=5 // pred_fallthru
        _
      %p848 = scmp.le.s32.totalorder 2, %s28
      // Predicated region
      $region73: #{tpu_custom_call.1} parent=5 // pred_check
        %p849 = pneg %p848
      $region74: #{tpu_custom_call.1} parent=5 // pred_check_branch
        %851 = sbr.rel (%p849) target = $region76
      $region75: #{tpu_custom_call.1} parent=5 // pred_region
        %s852 = ssub.s32 %s28, 2
        // Predicated region
        $region77: #{tpu_custom_call.1} parent=75 // pred_check
          %p853 = pneg %p172
        $region78: #{tpu_custom_call.1} parent=75 // pred_check_branch
          %855 = sbr.rel (%p853) target = $region80
        $region79: #{tpu_custom_call.1} parent=75 // pred_region
          %p856 = scmp.lt.s32.totalorder %s34, 1
          %s857 = scalar_select %p856, %s34, 1
          %s858 = smul.addr %s857, 8
          %s859 = smul.addr %s858, 8
          %s860 = scalar_lea.vmem %s7, %s859
        $region80: #{tpu_custom_call.1} parent=75 // pred_fallthru
          _
        // Predicated region
        $region81: #{tpu_custom_call.1} parent=75 // pred_check
          %p861 = pneg %p198
        $region82: #{tpu_custom_call.1} parent=75 // pred_check_branch
          %863 = sbr.rel (%p861) target = $region84
        $region83: #{tpu_custom_call.1} parent=75 // pred_region
          %s864 = sand.u32 %s183, 1
          %s865 = scalar_lea.sflag [#allocation6], %s864
          %s866 = sand.u32 %s183, 1
          %s867 = smul.addr %s866, 16
          %s868 = scalar_lea.vmem [#allocation5], %s867
          %869 = dma.done %s865, 256
        $region84: #{tpu_custom_call.1} parent=75 // pred_fallthru
          _
      $region76: #{tpu_custom_call.1} parent=5 // pred_fallthru
        _
    $region6: #{tpu_custom_call.1} parent=1 // loop_footer
      %s32 = sadd.s32 1, %s28
    $region7: #{tpu_custom_call.1} parent=1 // loop_footer_branch
      %27 = sbr.rel target = $region3
    $region8: #{tpu_custom_call.1} parent=1 // loop_exit
      _
    %870 = vsyncpa [#allocation6], 1
    %s871 = scalar_lea.sflag [#allocation6], 1
    %872 = vsyncpa %s871, 1

</llo_original>
